<compile_context>
chip_gen: v5e
topology: v5e:2x2
jax: 0.10.0
libtpu: 0.0.40
codegen_flags: <defaults>
</compile_context>

<pallas_src>
import jax
import jax.numpy as jnp
from jax.experimental import pallas as pl
from jax.experimental.pallas import tpu as pltpu

n_embd = 64
hidden = 4 * n_embd  # 256


def _ffn_kernel(x_ref, w1_ref, b1_ref, w2_ref, b2_ref, o_ref):
    # x_ref: (tm, PAIR*C) f32, w1_ref: (PAIR*C, PAIR*H) bf16, b1_ref: (1, PAIR*H) f32,
    # w2_ref: (PAIR*H, PAIR*C) bf16, b2_ref: (1, PAIR*C) f32, o_ref: (tm, PAIR*C) f32.
    xb = x_ref[...].astype(jnp.bfloat16)                 # in-kernel cast (hidden under DMA)
    h = jnp.dot(xb, w1_ref[...], preferred_element_type=jnp.float32)
    h = jnp.maximum(h + b1_ref[...], 0.0)                # bias + ReLU in f32
    y = jnp.dot(h.astype(jnp.bfloat16), w2_ref[...],
                preferred_element_type=jnp.float32)
    o_ref[...] = (y + b2_ref[...]).astype(o_ref.dtype)
    # TODO(synk): dropout p=0.0 is the identity; a nonzero p would need
    # pltpu.prng_seed / pltpu.prng_random_bits masking here.


def _pick_pair(C):
    """How many logical rows to pack per 128-lane physical row."""
    if C < 128 and 128 % C == 0:
        return 128 // C
    return 1


def _block_diag(w, n):
    """diag(w, ..., w) with n copies (n == 1 returns w unchanged)."""
    if n == 1:
        return w
    r, c = w.shape
    out = jnp.zeros((n * r, n * c), w.dtype)
    for i in range(n):
        out = out.at[i * r:(i + 1) * r, i * c:(i + 1) * c].set(w)
    return out


def _choose_tile(M2, tm_max):
    """Row tile in *packed* rows: as large as possible (<= tm_max) while keeping
    >= 4 grid steps when M2 allows (>= 2 pipelined steps per v7x TensorCore),
    rounded to the 8-sublane granule."""
    tm = min(tm_max, max(8, pl.cdiv(M2, 4)))
    return max(8, ((tm + 7) // 8) * 8)


def feed_forward(x, w1, b1, w2, b2, *, tm_max=2048):
    """x: (B, T, C) -> (B, T, C).  Weights: w1 (C, H), b1 (H,), w2 (H, C), b2 (C,).

    tm_max is in packed rows (each packed row holds PAIR=128//C logical rows).
    """
    B, T, C = x.shape
    H = w1.shape[1]
    M = B * T

    pair = _pick_pair(C)
    Cp, Hp = pair * C, pair * H
    M2 = pl.cdiv(M, pair)          # packed rows fed to the kernel
    M_pad = M2 * pair

    x2 = x.reshape(M, C)
    if M_pad != M:
        # Rare (M not a multiple of PAIR): pad at most PAIR-1 rows.
        x2 = jnp.pad(x2, ((0, M_pad - M), (0, 0)))
    x2 = x2.reshape(M2, Cp)        # free row-major reshape, no data movement

    # bf16 weights for the MXU, replicated block-diagonally so packed rows stay
    # independent; biases stay f32 (added to the f32 accumulator).
    w1p = _block_diag(w1.astype(jnp.bfloat16), pair)              # (Cp, Hp)
    w2p = _block_diag(w2.astype(jnp.bfloat16), pair)              # (Hp, Cp)
    b1p = jnp.tile(b1.astype(jnp.float32), pair).reshape(1, Hp)
    b2p = jnp.tile(b2.astype(jnp.float32), pair).reshape(1, Cp)

    tm = _choose_tile(M2, tm_max)
    grid = (pl.cdiv(M2, tm),)      # ragged last block handled by Pallas

    out = pl.pallas_call(
        _ffn_kernel,
        out_shape=jax.ShapeDtypeStruct((M2, Cp), x.dtype),
        grid=grid,
        in_specs=[
            pl.BlockSpec((tm, Cp), lambda i: (i, 0)),   # x rows (tiled, 128-lane dense)
            pl.BlockSpec((Cp, Hp), lambda i: (0, 0)),   # W1 (constant idx -> resident)
            pl.BlockSpec((1, Hp), lambda i: (0, 0)),    # b1
            pl.BlockSpec((Hp, Cp), lambda i: (0, 0)),   # W2
            pl.BlockSpec((1, Cp), lambda i: (0, 0)),    # b2
        ],
        out_specs=pl.BlockSpec((tm, Cp), lambda i: (i, 0)),
        compiler_params=pltpu.CompilerParams(
            dimension_semantics=("parallel",),
            # Large tiles exceed the 16 MiB scoped-VMEM default on v5e; actual
            # usage is well under v7x's 64 MiB physical VMEM.
            vmem_limit_bytes=48 * 1024 * 1024,
        ),
    )(x2, w1p, b1p, w2p, b2p)
    # If the x DMA is still exposed on a given gen, in_specs[0] can additionally
    # take pipeline_mode=pl.Buffered(3) for deeper prefetch (sweep 2 vs 3).

    y = out.reshape(M_pad, C)
    if M_pad != M:
        y = y[:M]
    return y.reshape(B, T, C)


def _reference(x, w1, b1, w2, b2):
    # Same precision recipe as the kernel: bf16 matmul operands, f32 accumulation.
    xb = x.astype(jnp.bfloat16)
    h = jnp.einsum("btc,ch->bth", xb, w1.astype(jnp.bfloat16),
                   preferred_element_type=jnp.float32) + b1
    h = jnp.maximum(h, 0.0)
    y = jnp.einsum("bth,hc->btc", h.astype(jnp.bfloat16), w2.astype(jnp.bfloat16),
                   preferred_element_type=jnp.float32) + b2
    return y.astype(x.dtype)


if __name__ == "__main__":
    key = jax.random.PRNGKey(0)
    k_x, k_w1, k_b1, k_w2, k_b2 = jax.random.split(key, 5)

    B, T, C, Hdim = 2, 8, n_embd, hidden

    x = jax.random.normal(k_x, (B, T, C), dtype=jnp.float32)
    # Deterministic synthetic params (PyTorch-Linear-like uniform scaling).
    w1 = jax.random.uniform(k_w1, (C, Hdim), minval=-1.0, maxval=1.0) / jnp.sqrt(C)
    b1 = jax.random.uniform(k_b1, (Hdim,), minval=-1.0, maxval=1.0) / jnp.sqrt(C)
    w2 = jax.random.uniform(k_w2, (Hdim, C), minval=-1.0, maxval=1.0) / jnp.sqrt(Hdim)
    b2 = jax.random.uniform(k_b2, (C,), minval=-1.0, maxval=1.0) / jnp.sqrt(Hdim)

    y = feed_forward(x, w1, b1, w2, b2)
    jax.block_until_ready(y)
    assert y.shape == (B, T, C)
    assert jnp.allclose(y, _reference(x, w1, b1, w2, b2), atol=2e-2, rtol=2e-2)

    # Multi-step grid + ragged last block + odd row count (exercises pad path).
    x_big = jax.random.normal(k_x, (3, 345, C), dtype=jnp.float32)
    y_big = feed_forward(x_big, w1, b1, w2, b2)
    jax.block_until_ready(y_big)
    assert y_big.shape == (3, 345, C)
    assert jnp.allclose(y_big, _reference(x_big, w1, b1, w2, b2),
                        atol=2e-2, rtol=2e-2)

    print("KERNEL_OK")
</pallas_src>

<mosaic_0001>
module attributes {stable_mosaic.version = 11 : i64} {
  func.func @_ffn_kernel(%arg0: i32, %arg1: memref<8x128xf32, #tpu.memory_space<vmem>>, %arg2: memref<128x512xbf16, #tpu.memory_space<vmem>>, %arg3: memref<1x512xf32, #tpu.memory_space<vmem>>, %arg4: memref<512x128xbf16, #tpu.memory_space<vmem>>, %arg5: memref<1x128xf32, #tpu.memory_space<vmem>>, %arg6: memref<8x128xf32, #tpu.memory_space<vmem>>) attributes {dimension_semantics = [#tpu.dimension_semantics<parallel>], iteration_bounds = array<i64: 1>, scalar_prefetch = 0 : i64, scratch_operands = 0 : i64, tpu.core_type = #tpu.core_type<tc>, window_params = [{transform_indices = @transform_0, window_bounds = array<i64: 8, 128>}, {pipeline_mode = #tpu.pipeline_mode<synchronous>, transform_indices = @transform_1, window_bounds = array<i64: 128, 512>}, {pipeline_mode = #tpu.pipeline_mode<synchronous>, transform_indices = @transform_2, window_bounds = array<i64: 1, 512>}, {pipeline_mode = #tpu.pipeline_mode<synchronous>, transform_indices = @transform_3, window_bounds = array<i64: 512, 128>}, {pipeline_mode = #tpu.pipeline_mode<synchronous>, transform_indices = @transform_4, window_bounds = array<i64: 1, 128>}, {transform_indices = @transform_5, window_bounds = array<i64: 8, 128>}]} {
    %c0 = arith.constant 0 : index
    %c0_0 = arith.constant 0 : index
    %0 = vector.load %arg1[%c0, %c0_0] : memref<8x128xf32, #tpu.memory_space<vmem>>, vector<8x128xf32>
    %1 = arith.truncf %0 : vector<8x128xf32> to vector<8x128xbf16>
    %c0_1 = arith.constant 0 : index
    %c0_2 = arith.constant 0 : index
    %2 = vector.load %arg2[%c0_1, %c0_2] : memref<128x512xbf16, #tpu.memory_space<vmem>>, vector<128x512xbf16>
    %cst = arith.constant dense<0.000000e+00> : vector<8x512xf32>
    %3 = tpu.matmul %1, %2, %cst {dimension_numbers = #tpu.dot_dimension_numbers<[1], [0], [0], [1], [0, 0, 1, 1], [], []>} : vector<8x128xbf16>, vector<128x512xbf16>, vector<8x512xf32> -> vector<8x512xf32>
    %c0_3 = arith.constant 0 : index
    %c0_4 = arith.constant 0 : index
    %4 = vector.load %arg3[%c0_3, %c0_4] : memref<1x512xf32, #tpu.memory_space<vmem>>, vector<1x512xf32>
    %5 = vector.broadcast %4 : vector<1x512xf32> to vector<8x512xf32>
    %6 = arith.addf %3, %5 : vector<8x512xf32>
    %cst_5 = arith.constant 0.000000e+00 : f32
    %7 = vector.broadcast %cst_5 : f32 to vector<8x512xf32>
    %8 = arith.maximumf %6, %7 : vector<8x512xf32>
    %9 = arith.truncf %8 : vector<8x512xf32> to vector<8x512xbf16>
    %c0_6 = arith.constant 0 : index
    %c0_7 = arith.constant 0 : index
    %10 = vector.load %arg4[%c0_6, %c0_7] : memref<512x128xbf16, #tpu.memory_space<vmem>>, vector<512x128xbf16>
    %cst_8 = arith.constant dense<0.000000e+00> : vector<8x128xf32>
    %11 = tpu.matmul %9, %10, %cst_8 {dimension_numbers = #tpu.dot_dimension_numbers<[1], [0], [0], [1], [0, 0, 1, 1], [], []>} : vector<8x512xbf16>, vector<512x128xbf16>, vector<8x128xf32> -> vector<8x128xf32>
    %c0_9 = arith.constant 0 : index
    %c0_10 = arith.constant 0 : index
    %12 = vector.load %arg5[%c0_9, %c0_10] : memref<1x128xf32, #tpu.memory_space<vmem>>, vector<1x128xf32>
    %13 = vector.broadcast %12 : vector<1x128xf32> to vector<8x128xf32>
    %14 = arith.addf %11, %13 : vector<8x128xf32>
    %c0_11 = arith.constant 0 : index
    %c0_12 = arith.constant 0 : index
    %15 = vector.load %arg6[%c0_11, %c0_12] : memref<8x128xf32, #tpu.memory_space<vmem>>, vector<8x128xf32>
    tpu.vector_store %arg6[%c0_11, %c0_12], %14 {strides = array<i32>} : memref<8x128xf32, #tpu.memory_space<vmem>>, vector<8x128xf32>,
    return
  }
  func.func @transform_0(%arg0: i32) -> (i32, i32) {
    %c0_i32 = arith.constant 0 : i32
    %c0_i32_0 = arith.constant 0 : i32
    return %arg0, %c0_i32 : i32, i32
  }
  func.func @transform_1(%arg0: i32) -> (i32, i32) {
    %c0_i32 = arith.constant 0 : i32
    %c0_i32_0 = arith.constant 0 : i32
    %c0_i32_1 = arith.constant 0 : i32
    return %c0_i32, %c0_i32_0 : i32, i32
  }
  func.func @transform_2(%arg0: i32) -> (i32, i32) {
    %c0_i32 = arith.constant 0 : i32
    %c0_i32_0 = arith.constant 0 : i32
    %c0_i32_1 = arith.constant 0 : i32
    return %c0_i32, %c0_i32_0 : i32, i32
  }
  func.func @transform_3(%arg0: i32) -> (i32, i32) {
    %c0_i32 = arith.constant 0 : i32
    %c0_i32_0 = arith.constant 0 : i32
    %c0_i32_1 = arith.constant 0 : i32
    return %c0_i32, %c0_i32_0 : i32, i32
  }
  func.func @transform_4(%arg0: i32) -> (i32, i32) {
    %c0_i32 = arith.constant 0 : i32
    %c0_i32_0 = arith.constant 0 : i32
    %c0_i32_1 = arith.constant 0 : i32
    return %c0_i32, %c0_i32_0 : i32, i32
  }
  func.func @transform_5(%arg0: i32) -> (i32, i32) {
    %c0_i32 = arith.constant 0 : i32
    %c0_i32_0 = arith.constant 0 : i32
    return %arg0, %c0_i32 : i32, i32
  }
}

</mosaic_0001>

<llo_original>
// kernel: tpu_custom_call.1
$region0: #{tpu_custom_call.1}
  #allocation0 [shape = 'u32[]', space=smem, size = 0x4, offset = 0x4, fixed_abs, tag = 'smem constant byte address 0x4 - core index']
  #allocation1 [shape = 'u32[72,128]{1,0:T(1,128)}', space=vmem, size = 0x9000, scoped, tag = 'internal scratch']
  %s0 = inlined_call_operand.hbm [shape: f32[8,128], index: 0, kind: input, shape index: {}]
  %s1 = inlined_call_operand.hbm [shape: bf16[128,512], index: 1, kind: input, shape index: {}]
  %s2 = inlined_call_operand.hbm [shape: f32[1,512], index: 2, kind: input, shape index: {}]
  %s3 = inlined_call_operand.hbm [shape: bf16[512,128], index: 3, kind: input, shape index: {}]
  %s4 = inlined_call_operand.vmem [shape: f32[1,128], index: 4, kind: input, shape index: {}]
  %s5 = inlined_call_operand.hbm [shape: f32[8,128], index: 5, kind: output, shape index: {}]
  %s6 = sld [smem:[#allocation0]]
  $region46: #{tpu_custom_call.1} parent=0
    _
  %s8 = ssub.s32 1, %s6
  %s9 = scalar_select 0, %s8, %s6
  $region1: #{tpu_custom_call.1} parent=0
    #allocation2 [shape = 'u8[4096]{0}', space=vmem, size = 0x1000, scoped, tag = 'input window, operand 0, single buffered']
    #allocation3 [shape = 's32[1]{0}', space=sflag, size = 0x4, scoped, tag = 'scoped memory for tpu_custom_call.1']
    #allocation4 [shape = 's32[1]{0}', space=sflag, size = 0x4, scoped, tag = 'scoped memory for tpu_custom_call.1']
    #allocation5 [shape = 'u8[131072]{0}', space=vmem, size = 0x20000, scoped, tag = 'input window, operand 1, single buffered']
    #allocation6 [shape = 's32[1]{0}', space=sflag, size = 0x4, scoped, tag = 'scoped memory for tpu_custom_call.1']
    #allocation7 [shape = 'u8[2048]{0}', space=vmem, size = 0x800, scoped, tag = 'input window, operand 2, single buffered']
    #allocation8 [shape = 'u8[131072]{0}', space=vmem, size = 0x20000, scoped, tag = 'input window, operand 3, single buffered']
    #allocation9 [shape = 's32[1]{0}', space=sflag, size = 0x4, scoped, tag = 'scoped memory for tpu_custom_call.1']
    #allocation10 [shape = 'u8[4096]{0}', space=vmem, size = 0x1000, scoped, tag = 'output window, operand 0, single buffered']
    %10 = vsyncpa [#allocation3], 0
    %11 = vsyncpa [#allocation6], 0
    %12 = vsyncpa [#allocation9], 0
    %13 = vsyncpa [#allocation4], 0
    // Predicated region
    $region2: #{tpu_custom_call.1} parent=1 // pred_check
      _
    $region3: #{tpu_custom_call.1} parent=1 // pred_check_branch
      %15 = sbr.rel (0) target = $region5
    $region4: #{tpu_custom_call.1} parent=1 // pred_region
      %17 = vsyncadd [#allocation3], 0
      %s19 = sshll.u32 %s0, 4
      %s20 = int_to_ptr.hbm [resolvable:$true] %s19
      %s21 = sshll.u32 [#allocation2], 4
      %s22 = int_to_ptr.vmem [resolvable:$true] %s21
      %24 = dma.hbm_to_vmem [thread:$0]  %s20, 128, %s22, [#allocation3]
    $region5: #{tpu_custom_call.1} parent=1 // pred_fallthru
      _
    // Predicated region
    $region6: #{tpu_custom_call.1} parent=1 // pred_check
      _
    $region7: #{tpu_custom_call.1} parent=1 // pred_check_branch
      %26 = sbr.rel (0) target = $region9
    $region8: #{tpu_custom_call.1} parent=1 // pred_region
      %28 = vsyncadd [#allocation6], 0
      %s29 = sshll.u32 %s1, 4
      %s30 = int_to_ptr.hbm [resolvable:$true] %s29
      %s31 = sshll.u32 [#allocation5], 4
      %s32 = int_to_ptr.vmem [resolvable:$true] %s31
      %37 = dma.hbm_to_vmem [thread:$0]  %s30, 4096, %s32, [#allocation6], 256, 256, 16
    $region9: #{tpu_custom_call.1} parent=1 // pred_fallthru
      _
    // Predicated region
    $region10: #{tpu_custom_call.1} parent=1 // pred_check
      _
    $region11: #{tpu_custom_call.1} parent=1 // pred_check_branch
      %39 = sbr.rel (0) target = $region13
    $region12: #{tpu_custom_call.1} parent=1 // pred_region
      %41 = vsyncadd [#allocation6], 0
      %s43 = sshll.u32 %s2, 4
      %s44 = int_to_ptr.hbm [resolvable:$true] %s43
      %s45 = sshll.u32 [#allocation7], 4
      %s46 = int_to_ptr.vmem [resolvable:$true] %s45
      %48 = dma.hbm_to_vmem [thread:$0]  %s44, 64, %s46, [#allocation6]
    $region13: #{tpu_custom_call.1} parent=1 // pred_fallthru
      _
    // Predicated region
    $region14: #{tpu_custom_call.1} parent=1 // pred_check
      _
    $region15: #{tpu_custom_call.1} parent=1 // pred_check_branch
      %50 = sbr.rel (0) target = $region17
    $region16: #{tpu_custom_call.1} parent=1 // pred_region
      %52 = vsyncadd [#allocation9], 0
      %s53 = sshll.u32 %s3, 4
      %s54 = int_to_ptr.hbm [resolvable:$true] %s53
      %s55 = sshll.u32 [#allocation8], 4
      %s56 = int_to_ptr.vmem [resolvable:$true] %s55
      %61 = dma.hbm_to_vmem [thread:$0]  %s54, 4096, %s56, [#allocation9], 64, 64, 4
    $region17: #{tpu_custom_call.1} parent=1 // pred_fallthru
      _
    // Predicated region
    $region18: #{tpu_custom_call.1} parent=1 // pred_check
      _
    $region19: #{tpu_custom_call.1} parent=1 // pred_check_branch
      %63 = sbr.rel (0) target = $region21
    $region20: #{tpu_custom_call.1} parent=1 // pred_region
      _
    $region21: #{tpu_custom_call.1} parent=1 // pred_fallthru
      _
    // Predicated region
    $region22: #{tpu_custom_call.1} parent=1 // pred_check
      _
    $region23: #{tpu_custom_call.1} parent=1 // pred_check_branch
      %65 = sbr.rel (0) target = $region25
    $region24: #{tpu_custom_call.1} parent=1 // pred_region
      %67 = dma.done [#allocation3], 128
    $region25: #{tpu_custom_call.1} parent=1 // pred_fallthru
      _
    // Predicated region
    $region26: #{tpu_custom_call.1} parent=1 // pred_check
      _
    $region27: #{tpu_custom_call.1} parent=1 // pred_check_branch
      %69 = sbr.rel (0) target = $region29
    $region28: #{tpu_custom_call.1} parent=1 // pred_region
      %71 = dma.done [#allocation6], 4096
    $region29: #{tpu_custom_call.1} parent=1 // pred_fallthru
      _
    // Predicated region
    $region30: #{tpu_custom_call.1} parent=1 // pred_check
      _
    $region31: #{tpu_custom_call.1} parent=1 // pred_check_branch
      %73 = sbr.rel (0) target = $region33
    $region32: #{tpu_custom_call.1} parent=1 // pred_region
      %75 = dma.done [#allocation6], 64
    $region33: #{tpu_custom_call.1} parent=1 // pred_fallthru
      _
    // Predicated region
    $region34: #{tpu_custom_call.1} parent=1 // pred_check
      _
    $region35: #{tpu_custom_call.1} parent=1 // pred_check_branch
      %77 = sbr.rel (0) target = $region37
    $region36: #{tpu_custom_call.1} parent=1 // pred_region
      %79 = dma.done [#allocation9], 4096
    $region37: #{tpu_custom_call.1} parent=1 // pred_fallthru
      _
    %v80 = vld [vmem:[#allocation2] sm:$0xff]
    %v81 = vpack.c.bf16 %v80, %v80
    %v82 = vld [vmem:[#allocation5] sm:$0xff]
    %v83 = vld [vmem:[#allocation5 + $0x8] sm:$0xff]
    %v84 = vld [vmem:[#allocation5 + $0x10] sm:$0xff]
    %v85 = vld [vmem:[#allocation5 + $0x18] sm:$0xff]
    %v86 = vld [vmem:[#allocation5 + $0x20] sm:$0xff]
    %v87 = vld [vmem:[#allocation5 + $0x28] sm:$0xff]
    %v88 = vld [vmem:[#allocation5 + $0x30] sm:$0xff]
    %v89 = vld [vmem:[#allocation5 + $0x38] sm:$0xff]
    %v90 = vld [vmem:[#allocation5 + $0x40] sm:$0xff]
    %v91 = vld [vmem:[#allocation5 + $0x48] sm:$0xff]
    %v92 = vld [vmem:[#allocation5 + $0x50] sm:$0xff]
    %v93 = vld [vmem:[#allocation5 + $0x58] sm:$0xff]
    %v94 = vld [vmem:[#allocation5 + $0x60] sm:$0xff]
    %v95 = vld [vmem:[#allocation5 + $0x68] sm:$0xff]
    %v96 = vld [vmem:[#allocation5 + $0x70] sm:$0xff]
    %v97 = vld [vmem:[#allocation5 + $0x78] sm:$0xff]
    %v98 = vld [vmem:[#allocation5 + $0x80] sm:$0xff]
    %v99 = vld [vmem:[#allocation5 + $0x88] sm:$0xff]
    %v100 = vld [vmem:[#allocation5 + $0x90] sm:$0xff]
    %v101 = vld [vmem:[#allocation5 + $0x98] sm:$0xff]
    %v102 = vld [vmem:[#allocation5 + $0xa0] sm:$0xff]
    %v103 = vld [vmem:[#allocation5 + $0xa8] sm:$0xff]
    %v104 = vld [vmem:[#allocation5 + $0xb0] sm:$0xff]
    %v105 = vld [vmem:[#allocation5 + $0xb8] sm:$0xff]
    %v106 = vld [vmem:[#allocation5 + $0xc0] sm:$0xff]
    %v107 = vld [vmem:[#allocation5 + $0xc8] sm:$0xff]
    %v108 = vld [vmem:[#allocation5 + $0xd0] sm:$0xff]
    %v109 = vld [vmem:[#allocation5 + $0xd8] sm:$0xff]
    %v110 = vld [vmem:[#allocation5 + $0xe0] sm:$0xff]
    %v111 = vld [vmem:[#allocation5 + $0xe8] sm:$0xff]
    %v112 = vld [vmem:[#allocation5 + $0xf0] sm:$0xff]
    %v113 = vld [vmem:[#allocation5 + $0xf8] sm:$0xff]
    %v114 = vld [vmem:[#allocation7] sm:$0xf]
    %v116 = vperm.slane %v114, 0
    %v117 = vperm.slane %v114, 1
    %v118 = vperm.slane %v114, 2
    %v119 = vperm.slane %v114, 3
    %v156 = vunpack.c.l.b16 %v82
    %v157 = vunpack.c.h.b16 %v82
    %v158 = vunpack.c.l.b16 %v83
    %v159 = vunpack.c.h.b16 %v83
    %v160 = vunpack.c.l.b16 %v84
    %v161 = vunpack.c.h.b16 %v84
    %v162 = vunpack.c.l.b16 %v85
    %v163 = vunpack.c.h.b16 %v85
    %v164 = vunpack.c.l.b16 %v86
    %v165 = vunpack.c.h.b16 %v86
    %v166 = vunpack.c.l.b16 %v87
    %v167 = vunpack.c.h.b16 %v87
    %v168 = vunpack.c.l.b16 %v88
    %v169 = vunpack.c.h.b16 %v88
    %v170 = vunpack.c.l.b16 %v89
    %v171 = vunpack.c.h.b16 %v89
    %v172 = vunpack.c.l.b16 %v90
    %v173 = vunpack.c.h.b16 %v90
    %v174 = vunpack.c.l.b16 %v91
    %v175 = vunpack.c.h.b16 %v91
    %v176 = vunpack.c.l.b16 %v92
    %v177 = vunpack.c.h.b16 %v92
    %v178 = vunpack.c.l.b16 %v93
    %v179 = vunpack.c.h.b16 %v93
    %v180 = vunpack.c.l.b16 %v94
    %v181 = vunpack.c.h.b16 %v94
    %v182 = vunpack.c.l.b16 %v95
    %v183 = vunpack.c.h.b16 %v95
    %v184 = vunpack.c.l.b16 %v96
    %v185 = vunpack.c.h.b16 %v96
    %v186 = vunpack.c.l.b16 %v97
    %v187 = vunpack.c.h.b16 %v97
    %v188 = vunpack.c.l.b16 %v98
    %v189 = vunpack.c.h.b16 %v98
    %v190 = vunpack.c.l.b16 %v99
    %v191 = vunpack.c.h.b16 %v99
    %v192 = vunpack.c.l.b16 %v100
    %v193 = vunpack.c.h.b16 %v100
    %v194 = vunpack.c.l.b16 %v101
    %v195 = vunpack.c.h.b16 %v101
    %v196 = vunpack.c.l.b16 %v102
    %v197 = vunpack.c.h.b16 %v102
    %v198 = vunpack.c.l.b16 %v103
    %v199 = vunpack.c.h.b16 %v103
    %v200 = vunpack.c.l.b16 %v104
    %v201 = vunpack.c.h.b16 %v104
    %v202 = vunpack.c.l.b16 %v105
    %v203 = vunpack.c.h.b16 %v105
    %v204 = vunpack.c.l.b16 %v106
    %v205 = vunpack.c.h.b16 %v106
    %v206 = vunpack.c.l.b16 %v107
    %v207 = vunpack.c.h.b16 %v107
    %v208 = vunpack.c.l.b16 %v108
    %v209 = vunpack.c.h.b16 %v108
    %v210 = vunpack.c.l.b16 %v109
    %v211 = vunpack.c.h.b16 %v109
    %v212 = vunpack.c.l.b16 %v110
    %v213 = vunpack.c.h.b16 %v110
    %v214 = vunpack.c.l.b16 %v111
    %v215 = vunpack.c.h.b16 %v111
    %v216 = vunpack.c.l.b16 %v112
    %v217 = vunpack.c.h.b16 %v112
    %v218 = vunpack.c.l.b16 %v113
    %v219 = vunpack.c.h.b16 %v113
    %v220 = vpack.c.b16 %v160, %v156
    %v221 = vpack.c.b16 %v161, %v157
    %v222 = vpack.c.b16 %v162, %v158
    %v223 = vpack.c.b16 %v163, %v159
    %v224 = vpack.c.b16 %v168, %v164
    %v225 = vpack.c.b16 %v169, %v165
    %v226 = vpack.c.b16 %v170, %v166
    %v227 = vpack.c.b16 %v171, %v167
    %v228 = vpack.c.b16 %v176, %v172
    %v229 = vpack.c.b16 %v177, %v173
    %v230 = vpack.c.b16 %v178, %v174
    %v231 = vpack.c.b16 %v179, %v175
    %v232 = vpack.c.b16 %v184, %v180
    %v233 = vpack.c.b16 %v185, %v181
    %v234 = vpack.c.b16 %v186, %v182
    %v235 = vpack.c.b16 %v187, %v183
    %v236 = vpack.c.b16 %v192, %v188
    %v237 = vpack.c.b16 %v193, %v189
    %v238 = vpack.c.b16 %v194, %v190
    %v239 = vpack.c.b16 %v195, %v191
    %v240 = vpack.c.b16 %v200, %v196
    %v241 = vpack.c.b16 %v201, %v197
    %v242 = vpack.c.b16 %v202, %v198
    %v243 = vpack.c.b16 %v203, %v199
    %v244 = vpack.c.b16 %v208, %v204
    %v245 = vpack.c.b16 %v209, %v205
    %v246 = vpack.c.b16 %v210, %v206
    %v247 = vpack.c.b16 %v211, %v207
    %v248 = vpack.c.b16 %v216, %v212
    %v249 = vpack.c.b16 %v217, %v213
    %v250 = vpack.c.b16 %v218, %v214
    %v251 = vpack.c.b16 %v219, %v215
    %284 = vmatpush.bf16.msra.mxu0 %v248
    %285 = vmatpush.bf16.msra.mxu0 %v244
    %286 = vmatpush.bf16.msra.mxu0 %v240
    %287 = vmatpush.bf16.msra.mxu0 %v236
    %288 = vmatpush.bf16.msra.mxu0 %v232
    %289 = vmatpush.bf16.msra.mxu0 %v228
    %290 = vmatpush.bf16.msra.mxu0 %v224
    %291 = vmatpush.bf16.msra.mxu0 %v220
    %292 = vmatmul.bf16.gmra.mxu0 %v81
    %v293 = vpop.f32.mrf.mxu0
    %v294 = vadd.f32 %v116, %v293
    %v295 = vpop.f32.mrf.mxu0
    %296 = vdwg.mxu0
    %297 = vmatpush.bf16.msra.mxu0 %v249
    %298 = vmatpush.bf16.msra.mxu0 %v245
    %299 = vmatpush.bf16.msra.mxu0 %v241
    %300 = vmatpush.bf16.msra.mxu0 %v237
    %301 = vmatpush.bf16.msra.mxu0 %v233
    %302 = vmatpush.bf16.msra.mxu0 %v229
    %303 = vmatpush.bf16.msra.mxu0 %v225
    %304 = vmatpush.bf16.msra.mxu0 %v221
    %305 = vmatmul.bf16.gmra.mxu0 %v81
    %v306 = vpop.f32.mrf.mxu0
    %v307 = vadd.f32 %v117, %v306
    %v308 = vpop.f32.mrf.mxu0
    %309 = vdwg.mxu0
    %310 = vmatpush.bf16.msra.mxu0 %v250
    %311 = vmatpush.bf16.msra.mxu0 %v246
    %312 = vmatpush.bf16.msra.mxu0 %v242
    %313 = vmatpush.bf16.msra.mxu0 %v238
    %314 = vmatpush.bf16.msra.mxu0 %v234
    %315 = vmatpush.bf16.msra.mxu0 %v230
    %316 = vmatpush.bf16.msra.mxu0 %v226
    %317 = vmatpush.bf16.msra.mxu0 %v222
    %318 = vmatmul.bf16.gmra.mxu0 %v81
    %v319 = vpop.f32.mrf.mxu0
    %v320 = vadd.f32 %v118, %v319
    %v321 = vpop.f32.mrf.mxu0
    %322 = vdwg.mxu0
    %323 = vmatpush.bf16.msra.mxu0 %v251
    %324 = vmatpush.bf16.msra.mxu0 %v247
    %325 = vmatpush.bf16.msra.mxu0 %v243
    %326 = vmatpush.bf16.msra.mxu0 %v239
    %327 = vmatpush.bf16.msra.mxu0 %v235
    %328 = vmatpush.bf16.msra.mxu0 %v231
    %329 = vmatpush.bf16.msra.mxu0 %v227
    %330 = vmatpush.bf16.msra.mxu0 %v223
    %331 = vmatmul.bf16.gmra.mxu0 %v81
    %v332 = vpop.f32.mrf.mxu0
    %v333 = vadd.f32 %v119, %v332
    %v334 = vpop.f32.mrf.mxu0
    %335 = vdwg.mxu0
    %v336 = vmax.f32 %v294, 0.0
    %v337 = vmax.f32 %v307, 0.0
    %v338 = vmax.f32 %v320, 0.0
    %v339 = vmax.f32 %v333, 0.0
    %v340 = vpack.c.bf16 %v336, %v336
    %v341 = vpack.c.bf16 %v337, %v337
    %v342 = vpack.c.bf16 %v338, %v338
    %v343 = vpack.c.bf16 %v339, %v339
    %v344 = vld [vmem:[#allocation8] sm:$0xf]
    %v345 = vld [vmem:[#allocation8 + $0x4] sm:$0xf]
    %v346 = vld [vmem:[#allocation8 + $0x8] sm:$0xf]
    %v347 = vld [vmem:[#allocation8 + $0xc] sm:$0xf]
    %v348 = vld [vmem:[#allocation8 + $0x10] sm:$0xf]
    %v349 = vld [vmem:[#allocation8 + $0x14] sm:$0xf]
    %v350 = vld [vmem:[#allocation8 + $0x18] sm:$0xf]
    %v351 = vld [vmem:[#allocation8 + $0x1c] sm:$0xf]
    %v352 = vld [vmem:[#allocation8 + $0x20] sm:$0xf]
    %v353 = vld [vmem:[#allocation8 + $0x24] sm:$0xf]
    %v354 = vld [vmem:[#allocation8 + $0x28] sm:$0xf]
    %v355 = vld [vmem:[#allocation8 + $0x2c] sm:$0xf]
    %v356 = vld [vmem:[#allocation8 + $0x30] sm:$0xf]
    %v357 = vld [vmem:[#allocation8 + $0x34] sm:$0xf]
    %v358 = vld [vmem:[#allocation8 + $0x38] sm:$0xf]
    %v359 = vld [vmem:[#allocation8 + $0x3c] sm:$0xf]
    %v360 = vld [vmem:[#allocation8 + $0x40] sm:$0xf]
    %v361 = vld [vmem:[#allocation8 + $0x44] sm:$0xf]
    %v362 = vld [vmem:[#allocation8 + $0x48] sm:$0xf]
    %v363 = vld [vmem:[#allocation8 + $0x4c] sm:$0xf]
    %v364 = vld [vmem:[#allocation8 + $0x50] sm:$0xf]
    %v365 = vld [vmem:[#allocation8 + $0x54] sm:$0xf]
    %v366 = vld [vmem:[#allocation8 + $0x58] sm:$0xf]
    %v367 = vld [vmem:[#allocation8 + $0x5c] sm:$0xf]
    %v368 = vld [vmem:[#allocation8 + $0x60] sm:$0xf]
    %v369 = vld [vmem:[#allocation8 + $0x64] sm:$0xf]
    %v370 = vld [vmem:[#allocation8 + $0x68] sm:$0xf]
    %v371 = vld [vmem:[#allocation8 + $0x6c] sm:$0xf]
    %v372 = vld [vmem:[#allocation8 + $0x70] sm:$0xf]
    %v373 = vld [vmem:[#allocation8 + $0x74] sm:$0xf]
    %v374 = vld [vmem:[#allocation8 + $0x78] sm:$0xf]
    %v375 = vld [vmem:[#allocation8 + $0x7c] sm:$0xf]
    %v376 = vld [vmem:[#allocation8 + $0x80] sm:$0xf]
    %v377 = vld [vmem:[#allocation8 + $0x84] sm:$0xf]
    %v378 = vld [vmem:[#allocation8 + $0x88] sm:$0xf]
    %v379 = vld [vmem:[#allocation8 + $0x8c] sm:$0xf]
    %v380 = vld [vmem:[#allocation8 + $0x90] sm:$0xf]
    %v381 = vld [vmem:[#allocation8 + $0x94] sm:$0xf]
    %v382 = vld [vmem:[#allocation8 + $0x98] sm:$0xf]
    %v383 = vld [vmem:[#allocation8 + $0x9c] sm:$0xf]
    %v384 = vld [vmem:[#allocation8 + $0xa0] sm:$0xf]
    %v385 = vld [vmem:[#allocation8 + $0xa4] sm:$0xf]
    %v386 = vld [vmem:[#allocation8 + $0xa8] sm:$0xf]
    %v387 = vld [vmem:[#allocation8 + $0xac] sm:$0xf]
    %v388 = vld [vmem:[#allocation8 + $0xb0] sm:$0xf]
    %v389 = vld [vmem:[#allocation8 + $0xb4] sm:$0xf]
    %v390 = vld [vmem:[#allocation8 + $0xb8] sm:$0xf]
    %v391 = vld [vmem:[#allocation8 + $0xbc] sm:$0xf]
    %v392 = vld [vmem:[#allocation8 + $0xc0] sm:$0xf]
    %v393 = vld [vmem:[#allocation8 + $0xc4] sm:$0xf]
    %v394 = vld [vmem:[#allocation8 + $0xc8] sm:$0xf]
    %v395 = vld [vmem:[#allocation8 + $0xcc] sm:$0xf]
    %v396 = vld [vmem:[#allocation8 + $0xd0] sm:$0xf]
    %v397 = vld [vmem:[#allocation8 + $0xd4] sm:$0xf]
    %v398 = vld [vmem:[#allocation8 + $0xd8] sm:$0xf]
    %v399 = vld [vmem:[#allocation8 + $0xdc] sm:$0xf]
    %v400 = vld [vmem:[#allocation8 + $0xe0] sm:$0xf]
    %v401 = vld [vmem:[#allocation8 + $0xe4] sm:$0xf]
    %v402 = vld [vmem:[#allocation8 + $0xe8] sm:$0xf]
    %v403 = vld [vmem:[#allocation8 + $0xec] sm:$0xf]
    %v404 = vld [vmem:[#allocation8 + $0xf0] sm:$0xf]
    %v405 = vld [vmem:[#allocation8 + $0xf4] sm:$0xf]
    %v406 = vld [vmem:[#allocation8 + $0xf8] sm:$0xf]
    %v407 = vld [vmem:[#allocation8 + $0xfc] sm:$0xf]
    %v408 = vld [vmem:[%s4] sm:$0x1]
    %v410 = vperm.slane %v408, 0
    %v476 = vunpack.c.l.b16 %v344
    %v477 = vunpack.c.l.b16 %v345
    %v478 = vunpack.c.l.b16 %v346
    %v479 = vunpack.c.l.b16 %v347
    %v480 = vunpack.c.l.b16 %v348
    %v481 = vunpack.c.l.b16 %v349
    %v482 = vunpack.c.l.b16 %v350
    %v483 = vunpack.c.l.b16 %v351
    %v484 = vunpack.c.l.b16 %v352
    %v485 = vunpack.c.l.b16 %v353
    %v486 = vunpack.c.l.b16 %v354
    %v487 = vunpack.c.l.b16 %v355
    %v488 = vunpack.c.l.b16 %v356
    %v489 = vunpack.c.l.b16 %v357
    %v490 = vunpack.c.l.b16 %v358
    %v491 = vunpack.c.l.b16 %v359
    %v492 = vunpack.c.l.b16 %v360
    %v493 = vunpack.c.l.b16 %v361
    %v494 = vunpack.c.l.b16 %v362
    %v495 = vunpack.c.l.b16 %v363
    %v496 = vunpack.c.l.b16 %v364
    %v497 = vunpack.c.l.b16 %v365
    %v498 = vunpack.c.l.b16 %v366
    %v499 = vunpack.c.l.b16 %v367
    %v500 = vunpack.c.l.b16 %v368
    %v501 = vunpack.c.l.b16 %v369
    %v502 = vunpack.c.l.b16 %v370
    %v503 = vunpack.c.l.b16 %v371
    %v504 = vunpack.c.l.b16 %v372
    %v505 = vunpack.c.l.b16 %v373
    %v506 = vunpack.c.l.b16 %v374
    %v507 = vunpack.c.l.b16 %v375
    %v508 = vunpack.c.l.b16 %v376
    %v509 = vunpack.c.l.b16 %v377
    %v510 = vunpack.c.l.b16 %v378
    %v511 = vunpack.c.l.b16 %v379
    %v512 = vunpack.c.l.b16 %v380
    %v513 = vunpack.c.l.b16 %v381
    %v514 = vunpack.c.l.b16 %v382
    %v515 = vunpack.c.l.b16 %v383
    %v516 = vunpack.c.l.b16 %v384
    %v517 = vunpack.c.l.b16 %v385
    %v518 = vunpack.c.l.b16 %v386
    %v519 = vunpack.c.l.b16 %v387
    %v520 = vunpack.c.l.b16 %v388
    %v521 = vunpack.c.l.b16 %v389
    %v522 = vunpack.c.l.b16 %v390
    %v523 = vunpack.c.l.b16 %v391
    %v524 = vunpack.c.l.b16 %v392
    %v525 = vunpack.c.l.b16 %v393
    %v526 = vunpack.c.l.b16 %v394
    %v527 = vunpack.c.l.b16 %v395
    %v528 = vunpack.c.l.b16 %v396
    %v529 = vunpack.c.l.b16 %v397
    %v530 = vunpack.c.l.b16 %v398
    %v531 = vunpack.c.l.b16 %v399
    %v532 = vunpack.c.l.b16 %v400
    %v533 = vunpack.c.l.b16 %v401
    %v534 = vunpack.c.l.b16 %v402
    %v535 = vunpack.c.l.b16 %v403
    %v536 = vunpack.c.l.b16 %v404
    %v537 = vunpack.c.l.b16 %v405
    %v538 = vunpack.c.l.b16 %v406
    %v539 = vunpack.c.l.b16 %v407
    %v540 = vpack.c.b16 %v477, %v476
    %v541 = vpack.c.b16 %v479, %v478
    %v542 = vpack.c.b16 %v481, %v480
    %v543 = vpack.c.b16 %v483, %v482
    %v544 = vpack.c.b16 %v485, %v484
    %v545 = vpack.c.b16 %v487, %v486
    %v546 = vpack.c.b16 %v489, %v488
    %v547 = vpack.c.b16 %v491, %v490
    %v548 = vpack.c.b16 %v493, %v492
    %v549 = vpack.c.b16 %v495, %v494
    %v550 = vpack.c.b16 %v497, %v496
    %v551 = vpack.c.b16 %v499, %v498
    %v552 = vpack.c.b16 %v501, %v500
    %v553 = vpack.c.b16 %v503, %v502
    %v554 = vpack.c.b16 %v505, %v504
    %v555 = vpack.c.b16 %v507, %v506
    %v556 = vpack.c.b16 %v509, %v508
    %v557 = vpack.c.b16 %v511, %v510
    %v558 = vpack.c.b16 %v513, %v512
    %v559 = vpack.c.b16 %v515, %v514
    %v560 = vpack.c.b16 %v517, %v516
    %v561 = vpack.c.b16 %v519, %v518
    %v562 = vpack.c.b16 %v521, %v520
    %v563 = vpack.c.b16 %v523, %v522
    %v564 = vpack.c.b16 %v525, %v524
    %v565 = vpack.c.b16 %v527, %v526
    %v566 = vpack.c.b16 %v529, %v528
    %v567 = vpack.c.b16 %v531, %v530
    %v568 = vpack.c.b16 %v533, %v532
    %v569 = vpack.c.b16 %v535, %v534
    %v570 = vpack.c.b16 %v537, %v536
    %v571 = vpack.c.b16 %v539, %v538
    %604 = vmatpush.bf16.msra.mxu0 %v547
    %605 = vmatpush.bf16.msra.mxu0 %v546
    %606 = vmatpush.bf16.msra.mxu0 %v545
    %607 = vmatpush.bf16.msra.mxu0 %v544
    %608 = vmatpush.bf16.msra.mxu0 %v543
    %609 = vmatpush.bf16.msra.mxu0 %v542
    %610 = vmatpush.bf16.msra.mxu0 %v541
    %611 = vmatpush.bf16.msra.mxu0 %v540
    %612 = vmatmul.bf16.gmra.mxu0 %v340
    %v613 = vpop.f32.mrf.mxu0
    %v614 = vadd.f32 %v410, %v613
    %v615 = vpop.f32.mrf.mxu0
    %616 = vdwg.mxu0
    %617 = vmatpush.bf16.msra.mxu0 %v555
    %618 = vmatpush.bf16.msra.mxu0 %v554
    %619 = vmatpush.bf16.msra.mxu0 %v553
    %620 = vmatpush.bf16.msra.mxu0 %v552
    %621 = vmatpush.bf16.msra.mxu0 %v551
    %622 = vmatpush.bf16.msra.mxu0 %v550
    %623 = vmatpush.bf16.msra.mxu0 %v549
    %624 = vmatpush.bf16.msra.mxu0 %v548
    %625 = vmatmul.bf16.gmra.mxu0 %v341
    %v626 = vpop.f32.mrf.mxu0
    %v627 = vadd.f32 %v614, %v626
    %v628 = vpop.f32.mrf.mxu0
    %629 = vdwg.mxu0
    %630 = vmatpush.bf16.msra.mxu0 %v563
    %631 = vmatpush.bf16.msra.mxu0 %v562
    %632 = vmatpush.bf16.msra.mxu0 %v561
    %633 = vmatpush.bf16.msra.mxu0 %v560
    %634 = vmatpush.bf16.msra.mxu0 %v559
    %635 = vmatpush.bf16.msra.mxu0 %v558
    %636 = vmatpush.bf16.msra.mxu0 %v557
    %637 = vmatpush.bf16.msra.mxu0 %v556
    %638 = vmatmul.bf16.gmra.mxu0 %v342
    %v639 = vpop.f32.mrf.mxu0
    %v640 = vadd.f32 %v627, %v639
    %v641 = vpop.f32.mrf.mxu0
    %642 = vdwg.mxu0
    %643 = vmatpush.bf16.msra.mxu0 %v571
    %644 = vmatpush.bf16.msra.mxu0 %v570
    %645 = vmatpush.bf16.msra.mxu0 %v569
    %646 = vmatpush.bf16.msra.mxu0 %v568
    %647 = vmatpush.bf16.msra.mxu0 %v567
    %648 = vmatpush.bf16.msra.mxu0 %v566
    %649 = vmatpush.bf16.msra.mxu0 %v565
    %650 = vmatpush.bf16.msra.mxu0 %v564
    %651 = vmatmul.bf16.gmra.mxu0 %v343
    %v652 = vpop.f32.mrf.mxu0
    %v653 = vadd.f32 %v640, %v652
    %v654 = vpop.f32.mrf.mxu0
    %655 = vdwg.mxu0
    %656 = vst [vmem:[#allocation10] sm:$0xff] %v653
    // Predicated region
    $region38: #{tpu_custom_call.1} parent=1 // pred_check
      _
    $region39: #{tpu_custom_call.1} parent=1 // pred_check_branch
      %658 = sbr.rel (0) target = $region41
    $region40: #{tpu_custom_call.1} parent=1 // pred_region
      %660 = vsyncadd [#allocation4], 0
      %s662 = sshll.u32 [#allocation10], 4
      %s663 = int_to_ptr.vmem [resolvable:$true] %s662
      %s664 = sshll.u32 %s5, 4
      %s665 = int_to_ptr.hbm [resolvable:$true] %s664
      %667 = dma.vmem_to_hbm [thread:$0]  %s663, 128, %s665, [#allocation4]
    $region41: #{tpu_custom_call.1} parent=1 // pred_fallthru
      _
    // Predicated region
    $region42: #{tpu_custom_call.1} parent=1 // pred_check
      _
    $region43: #{tpu_custom_call.1} parent=1 // pred_check_branch
      %669 = sbr.rel (0) target = $region45
    $region44: #{tpu_custom_call.1} parent=1 // pred_region
      %671 = dma.done [#allocation4], 128
    $region45: #{tpu_custom_call.1} parent=1 // pred_fallthru
      _
    %672 = vsyncpa [#allocation3], 1
    %673 = vsyncpa [#allocation6], 1
    %674 = vsyncpa [#allocation9], 1
    %675 = vsyncpa [#allocation4], 1

</llo_original>
